<compile_context>
chip_gen: v6e
topology: v6e:2x2x1
jax: 0.10.0
libtpu: 0.0.40
codegen_flags: <defaults>
</compile_context>

<pallas_src>
import jax
import jax.numpy as jnp
import numpy as np
from jax.experimental import pallas as pl
from jax.experimental.pallas import tpu as pltpu


def _round_up(v, m):
    return (v + m - 1) // m * m


# --------------------------- tiled GEMM (MXU) --------------------------------

def _matmul_kernel(x_ref, w_ref, o_ref, acc_ref):
    @pl.when(pl.program_id(2) == 0)
    def _():
        acc_ref[...] = jnp.zeros_like(acc_ref)

    acc_ref[...] += jnp.dot(x_ref[...], w_ref[...],
                            preferred_element_type=jnp.float32)

    @pl.when(pl.program_id(2) == pl.num_programs(2) - 1)
    def _():
        o_ref[...] = acc_ref[...].astype(o_ref.dtype)


def _tile_dim(dim, pref):
    # single full-extent block when small, otherwise pad to a tile multiple
    if dim <= pref:
        return dim, dim
    return pref, _round_up(dim, pref)


def pallas_matmul(x, w, *, tm=512, tk=256, tn=256):
    """C = A @ B with a pipelined, K-accumulating Pallas GEMM."""
    M, K = x.shape
    K2, N = w.shape
    assert K == K2
    x = x.astype(jnp.float32)
    w = w.astype(jnp.float32)
    tm, Mp = _tile_dim(M, tm)
    tk, Kp = _tile_dim(K, tk)
    tn, Np = _tile_dim(N, tn)
    if (Mp, Kp) != (M, K):
        x = jnp.pad(x, ((0, Mp - M), (0, Kp - K)))
    if (Kp, Np) != (K, N):
        w = jnp.pad(w, ((0, Kp - K), (0, Np - N)))
    out = pl.pallas_call(
        _matmul_kernel,
        out_shape=jax.ShapeDtypeStruct((Mp, Np), jnp.float32),
        grid=(Mp // tm, Np // tn, Kp // tk),
        in_specs=[pl.BlockSpec((tm, tk), lambda i, j, k: (i, k)),
                  pl.BlockSpec((tk, tn), lambda i, j, k: (k, j))],
        out_specs=pl.BlockSpec((tm, tn), lambda i, j, k: (i, j)),
        scratch_shapes=[pltpu.VMEM((tm, tn), jnp.float32)],
        compiler_params=pltpu.CompilerParams(
            dimension_semantics=("parallel", "parallel", "arbitrary")),
        cost_estimate=pl.CostEstimate(
            flops=2 * Mp * Np * Kp, transcendentals=0,
            bytes_accessed=4 * (Mp * Kp + Kp * Np + Mp * Np)),
    )(x, w)
    if (Mp, Np) != (M, N):
        out = out[:M, :N]
    return out


# ------------------------------ Linear ---------------------------------------

def _linear_kernel(x_ref, w_ref, b_ref, o_ref):
    o_ref[...] = (jnp.dot(x_ref[...], w_ref[...],
                          preferred_element_type=jnp.float32) + b_ref[...])


def pallas_linear(x, w, b):
    M, K = x.shape
    _, N = w.shape
    return pl.pallas_call(
        _linear_kernel,
        out_shape=jax.ShapeDtypeStruct((M, N), jnp.float32),
        grid=(1,),
        in_specs=[pl.BlockSpec((M, K), lambda i: (0, 0)),
                  pl.BlockSpec((K, N), lambda i: (0, 0)),
                  pl.BlockSpec((1, N), lambda i: (0, 0))],
        out_specs=pl.BlockSpec((M, N), lambda i: (0, 0)),
    )(x.astype(jnp.float32), w.astype(jnp.float32),
      b.reshape(1, N).astype(jnp.float32))


# ------------------- GroupNorm (+ fused residual add + ReLU) -----------------

def _make_gn_kernel(apply_relu, has_residual, eps=1e-5):
    def kernel(x_ref, g_ref, b_ref, a_ref, *rest):
        if has_residual:
            res_ref, o_ref = rest
        else:
            (o_ref,) = rest
        x = x_ref[...]                                     # (bn, HW, C)
        A = a_ref[...]                                     # (C, C) group-avg matrix
        mean_c = jnp.dot(jnp.sum(x, axis=1), A,
                         preferred_element_type=jnp.float32)        # (bn, C)
        xm = x - mean_c[:, None, :]
        var_c = jnp.dot(jnp.sum(xm * xm, axis=1), A,
                        preferred_element_type=jnp.float32)         # (bn, C)
        scale = jax.lax.rsqrt(var_c + eps) * g_ref[...]             # (bn, C)
        y = xm * scale[:, None, :] + b_ref[...]
        if has_residual:
            y = y + res_ref[...]
        if apply_relu:
            y = jnp.maximum(y, 0.0)
        o_ref[...] = y
    return kernel


def group_norm(x, gamma, beta, num_groups, apply_relu=False, residual=None):
    N, H, W, C = x.shape
    HW = H * W
    cg = C // num_groups
    gid = jnp.arange(C) // cg
    # A[c, c'] = 1/(HW*cg) if same group else 0  -> (per-channel sums) @ A = group mean
    A = (gid[:, None] == gid[None, :]).astype(jnp.float32) / float(HW * cg)
    xr = x.reshape(N, HW, C).astype(jnp.float32)
    # GN stats are per-sample, so chunk along the batch only.
    # TODO(synk): for very large H*W, tile spatially with a partial-sum pass.
    bn = N if N * HW * C * 4 <= (4 << 20) else 1
    inputs = [xr, gamma.reshape(1, C).astype(jnp.float32),
              beta.reshape(1, C).astype(jnp.float32), A]
    in_specs = [pl.BlockSpec((bn, HW, C), lambda n: (n, 0, 0)),
                pl.BlockSpec((1, C), lambda n: (0, 0)),
                pl.BlockSpec((1, C), lambda n: (0, 0)),
                pl.BlockSpec((C, C), lambda n: (0, 0))]
    if residual is not None:
        inputs.append(residual.reshape(N, HW, C).astype(jnp.float32))
        in_specs.append(pl.BlockSpec((bn, HW, C), lambda n: (n, 0, 0)))
    out = pl.pallas_call(
        _make_gn_kernel(apply_relu, residual is not None),
        out_shape=jax.ShapeDtypeStruct((N, HW, C), jnp.float32),
        grid=(N // bn,),
        in_specs=in_specs,
        out_specs=pl.BlockSpec((bn, HW, C), lambda n: (n, 0, 0)),
        compiler_params=pltpu.CompilerParams(dimension_semantics=("parallel",)),
    )(*inputs)
    return out.reshape(N, H, W, C)


# --------------------------- MaxPool 3x3 s2 p1 --------------------------------

def _max9_kernel(t_ref, o_ref):
    m = t_ref[0]
    for k in range(1, 9):
        m = jnp.maximum(m, t_ref[k])
    o_ref[...] = m


def maxpool_3x3_s2_p1(x):
    # Stride-2 output is computed directly: the 9 strided taps are gathered as
    # glue (no 4x dense stride-1 map), the 9-way max runs lane-dense (rows,128).
    N, H, W, C = x.shape
    Ho = (H + 2 - 3) // 2 + 1
    Wo = (W + 2 - 3) // 2 + 1
    xp = jnp.pad(x, ((0, 0), (1, 1), (1, 1), (0, 0)), constant_values=-jnp.inf)
    taps = [xp[:, di:di + 2 * (Ho - 1) + 1:2, dj:dj + 2 * (Wo - 1) + 1:2, :]
            for di in range(3) for dj in range(3)]
    t = jnp.stack(taps, axis=0).reshape(9, -1)           # (9, N*Ho*Wo*C)
    T = t.shape[1]
    Tp = _round_up(T, 8 * 128)
    if Tp != T:
        t = jnp.pad(t, ((0, 0), (0, Tp - T)), constant_values=-jnp.inf)
    rows = Tp // 128
    t = t.reshape(9, rows, 128)
    br = min(rows, 1024)
    rows_p = _round_up(rows, br)
    if rows_p != rows:
        t = jnp.pad(t, ((0, 0), (0, rows_p - rows), (0, 0)),
                    constant_values=-jnp.inf)
    out = pl.pallas_call(
        _max9_kernel,
        out_shape=jax.ShapeDtypeStruct((rows_p, 128), jnp.float32),
        grid=(rows_p // br,),
        in_specs=[pl.BlockSpec((9, br, 128), lambda i: (0, i, 0))],
        out_specs=pl.BlockSpec((br, 128), lambda i: (i, 0)),
        compiler_params=pltpu.CompilerParams(dimension_semantics=("parallel",)),
    )(t)
    return out.reshape(-1)[:T].reshape(N, Ho, Wo, C)


# --------------------------- global average pool ------------------------------

def _avgpool_kernel(x_ref, o_ref):
    o_ref[...] = jnp.mean(x_ref[...], axis=1)


def global_avg_pool(x):
    # TODO(synk): whole batch in one block; tile over H*W with partial sums for
    # very large feature maps.
    N, H, W, C = x.shape
    xr = x.reshape(N, H * W, C).astype(jnp.float32)
    return pl.pallas_call(
        _avgpool_kernel,
        out_shape=jax.ShapeDtypeStruct((N, C), jnp.float32),
        grid=(1,),
        in_specs=[pl.BlockSpec((N, H * W, C), lambda i: (0, 0, 0))],
        out_specs=pl.BlockSpec((N, C), lambda i: (0, 0)),
    )(xr)


# --------------------------------- conv ---------------------------------------

def _weights_to_taps(w, groups):
    """(Cout, Cin/groups, kh, kw) -> (kh*kw, Cin, Cout); block-diagonal over groups."""
    Cout, cin_g, kh, kw = w.shape
    cout_g = Cout // groups
    wt = jnp.transpose(w, (2, 3, 1, 0)).astype(jnp.float32)   # (kh, kw, cin_g, Cout)
    if groups == 1:
        return wt.reshape(kh * kw, cin_g, Cout)
    wt = wt.reshape(kh, kw, cin_g, groups, cout_g)
    eye = jnp.eye(groups, dtype=jnp.float32)
    wfull = jnp.einsum('hwcgo,Gg->hwGcgo', wt, eye)           # zero off-group blocks
    return wfull.reshape(kh * kw, groups * cin_g, Cout)


def _make_conv_s1_kernel(Wp, Ho, kh, kw):
    L = Ho * Wp

    def kernel(x_ref, w_ref, o_ref):
        acc = None
        for t in range(kh * kw):
            off = (t // kw) * Wp + (t % kw)
            c = jnp.dot(x_ref[0, off:off + L, :], w_ref[t],
                        preferred_element_type=jnp.float32)
            acc = c if acc is None else acc + c
        o_ref[0] = acc

    return kernel


def _conv_s1_fused(x, w, padding, groups):
    """k x k stride-1 conv: in-kernel accumulation over the kh*kw taps on the
    flattened padded input ("shifted flat matmul") -- no im2col in HBM."""
    N, H, W, Cin = x.shape
    Cout, cin_g, kh, kw = w.shape
    p = padding
    Hp, Wp = H + 2 * p, W + 2 * p
    Ho, Wo = Hp - kh + 1, Wp - kw + 1
    xp = jnp.pad(x, ((0, 0), (p, p), (p, p), (0, 0))).reshape(N, Hp * Wp, Cin)
    flat_len = _round_up(Hp * Wp + kw - 1, 8)     # tail slack for the last taps
    xp = jnp.pad(xp, ((0, 0), (0, flat_len - Hp * Wp), (0, 0)))
    wtaps = _weights_to_taps(w, groups)           # (kh*kw, Cin, Cout)
    out = pl.pallas_call(
        _make_conv_s1_kernel(Wp, Ho, kh, kw),
        out_shape=jax.ShapeDtypeStruct((N, Ho * Wp, Cout), jnp.float32),
        grid=(N,),
        in_specs=[pl.BlockSpec((1, flat_len, Cin), lambda n: (n, 0, 0)),
                  pl.BlockSpec((kh * kw, Cin, Cout), lambda n: (0, 0, 0))],
        out_specs=pl.BlockSpec((1, Ho * Wp, Cout), lambda n: (n, 0, 0)),
        compiler_params=pltpu.CompilerParams(dimension_semantics=("parallel",)),
    )(xp.astype(jnp.float32), wtaps)
    # output columns [Wo:Wp) are the wrap-around overhang -> discard
    return out.reshape(N, Ho, Wp, Cout)[:, :, :Wo, :]


def _conv_gemm(x, w, stride, padding, groups):
    """1x1 convs (any stride) and strided k x k convs via (im2col +) tiled GEMM."""
    N, H, W, Cin = x.shape
    Cout, cin_g, kh, kw = w.shape
    Ho = (H + 2 * padding - kh) // stride + 1
    Wo = (W + 2 * padding - kw) // stride + 1
    if kh == 1 and kw == 1:
        xs = x[:, ::stride, ::stride, :][:, :Ho, :Wo, :]
        patches = xs.reshape(N * Ho * Wo, Cin)
    else:
        # TODO(synk): strided spatial convs (conv1 and layer2's first block)
        # still go through im2col; a phase-decomposed fused kernel would avoid
        # the kh*kw duplication here as well.
        xp = jnp.pad(x, ((0, 0), (padding, padding), (padding, padding), (0, 0)))
        cols = [xp[:, di:di + stride * (Ho - 1) + 1:stride,
                   dj:dj + stride * (Wo - 1) + 1:stride, :]
                for di in range(kh) for dj in range(kw)]
        patches = jnp.concatenate(cols, axis=-1).reshape(N * Ho * Wo, kh * kw * Cin)
    wmat = _weights_to_taps(w, groups).reshape(kh * kw * Cin, Cout)
    out = pallas_matmul(patches, wmat)
    return out.reshape(N, Ho, Wo, Cout)


def conv2d(x, w, stride=1, padding=0, groups=1):
    kh, kw = w.shape[2], w.shape[3]
    if stride == 1 and (kh > 1 or kw > 1):
        return _conv_s1_fused(x, w, padding, groups)
    return _conv_gemm(x, w, stride, padding, groups)


# ------------------------- pure-JAX reference ops ------------------------------

def ref_conv(x, w, stride=1, padding=0, groups=1):
    return jax.lax.conv_general_dilated(
        x, jnp.transpose(w, (2, 3, 1, 0)),
        window_strides=(stride, stride),
        padding=((padding, padding), (padding, padding)),
        dimension_numbers=('NHWC', 'HWIO', 'NHWC'),
        feature_group_count=groups)


def ref_group_norm(x, gamma, beta, G, apply_relu=False, residual=None, eps=1e-5):
    N, H, W, C = x.shape
    xr = x.reshape(N, H * W, G, C // G)
    mean = xr.mean(axis=(1, 3), keepdims=True)
    var = ((xr - mean) ** 2).mean(axis=(1, 3), keepdims=True)
    y = ((xr - mean) / jnp.sqrt(var + eps)).reshape(N, H, W, C) * gamma + beta
    if residual is not None:
        y = y + residual
    return jnp.maximum(y, 0.0) if apply_relu else y


def ref_maxpool(x):
    return jax.lax.reduce_window(x, -jnp.inf, jax.lax.max,
                                 (1, 3, 3, 1), (1, 2, 2, 1),
                                 ((0, 0), (1, 1), (1, 1), (0, 0)))


def ref_avgpool(x):
    return x.mean(axis=(1, 2))


def ref_linear(x, w, b):
    return x @ w + b.reshape(1, -1)


# ---------------------------------- model --------------------------------------

def init_params(cfg, key):
    keys = iter(jax.random.split(key, 128))

    def conv_w(cout, cin, k):
        return 0.1 * jax.random.normal(next(keys), (cout, cin, k, k), jnp.float32)

    def gn_p(c):
        return (1.0 + 0.1 * jax.random.normal(next(keys), (c,), jnp.float32),
                0.1 * jax.random.normal(next(keys), (c,), jnp.float32))

    d1, d2, d3 = cfg['dim_1'], cfg['dim_2'], cfg['dim_3']
    p = {}
    p['conv1_w'] = conv_w(d1, 3, cfg['kernel_1'])
    p['gn1_g'], p['gn1_b'] = gn_p(d1)

    def bottleneck_params(cin, cout, k, has_shortcut):
        mid = cout // 4
        groups = mid if mid % 32 == 0 else 1
        bp = {'groups': groups,
              'c1_w': conv_w(mid, cin, 1), 'g1': gn_p(mid),
              'c2_w': conv_w(mid, mid // groups, k), 'g2': gn_p(mid),
              'c3_w': conv_w(cout, mid, 1), 'g3': gn_p(cout)}
        if has_shortcut:
            bp['sc_w'] = conv_w(cout, cin, 1)
            bp['gs'] = gn_p(cout)
        return bp

    p['layer1'], p['layer2'] = [], []
    in_c = d1
    for b in range(cfg['num_blocks_1']):
        stride = 1
        has_sc = (stride != 1) or (in_c != d2)
        p['layer1'].append((bottleneck_params(in_c, d2, cfg['kernel_2'], has_sc),
                            stride, cfg['kernel_2']))
        in_c = d2
    for b in range(cfg['num_blocks_2']):
        stride = 2 if b == 0 else 1
        has_sc = (stride != 1) or (in_c != d3)
        p['layer2'].append((bottleneck_params(in_c, d3, cfg['kernel_3'], has_sc),
                            stride, cfg['kernel_3']))
        in_c = d3

    p['fc_w'] = 0.1 * jax.random.normal(next(keys), (cfg['out_channels'], d3), jnp.float32)
    p['fc_b'] = 0.1 * jax.random.normal(next(keys), (cfg['out_channels'],), jnp.float32)
    return p


def bottleneck_forward(x, bp, stride, k, ops):
    groups = bp['groups']
    padding = k // 2
    r = ops['conv'](x, bp['c1_w'], 1, 0)
    r = ops['gn'](r, *bp['g1'], groups, apply_relu=True)
    r = ops['conv'](r, bp['c2_w'], stride, padding, groups=groups)
    r = ops['gn'](r, *bp['g2'], groups, apply_relu=True)
    r = ops['conv'](r, bp['c3_w'], 1, 0)
    if 'sc_w' in bp:
        s = ops['conv'](x, bp['sc_w'], stride, 0)
        s = ops['gn'](s, *bp['gs'], groups, apply_relu=False)
    else:
        s = x
    # TODO(synk): torch F.pad's the shortcut when residual/shortcut spatial sizes
    # differ; with the same-padding convs used by this module they never differ.
    # Final GroupNorm + residual add + ReLU fused into one kernel.
    return ops['gn'](r, *bp['g3'], groups, apply_relu=True, residual=s)


def forward(params, x_nhwc, cfg, ops):
    d1 = cfg['dim_1']
    groups1 = d1 if d1 % 32 == 0 else 1
    x = ops['conv'](x_nhwc, params['conv1_w'], 2, cfg['kernel_1'] // 2)
    x = ops['gn'](x, params['gn1_g'], params['gn1_b'], groups1, apply_relu=True)
    x = ops['maxpool'](x)
    for bp, stride, k in params['layer1'] + params['layer2']:
        x = bottleneck_forward(x, bp, stride, k, ops)
    w = ops['avgpool'](x)
    y = ops['linear'](w, params['fc_w'].T, params['fc_b'])
    return x, w, y


if __name__ == "__main__":
    # dim_2=128 makes layer1's bottleneck grouped (mid=32 -> groups=32), so the
    # grouped / block-diagonal conv path and size-1-group GN are exercised too.
    cfg = dict(out_channels=10, dim_1=16, dim_2=128, dim_3=64,
               kernel_1=3, kernel_2=3, kernel_3=3,
               num_blocks_1=1, num_blocks_2=2)
    key = jax.random.PRNGKey(0)
    kp, kx = jax.random.split(key)
    params = init_params(cfg, kp)

    x_nchw = jax.random.normal(kx, (2, 3, 16, 16), jnp.float32)   # PyTorch NCHW input
    x_nhwc = jnp.transpose(x_nchw, (0, 2, 3, 1))

    ops_pallas = dict(conv=conv2d, gn=group_norm, maxpool=maxpool_3x3_s2_p1,
                      avgpool=global_avg_pool, linear=pallas_linear)
    ops_ref = dict(conv=ref_conv, gn=ref_group_norm, maxpool=ref_maxpool,
                   avgpool=ref_avgpool, linear=ref_linear)

    x_out, w_out, y_out = forward(params, x_nhwc, cfg, ops_pallas)
    jax.block_until_ready((x_out, w_out, y_out))

    # independent pure-JAX reference check
    xr, wr, yr = forward(params, x_nhwc, cfg, ops_ref)
    assert np.allclose(np.asarray(x_out), np.asarray(xr), atol=5e-4, rtol=5e-4)
    assert np.allclose(np.asarray(w_out), np.asarray(wr), atol=5e-4, rtol=5e-4)
    assert np.allclose(np.asarray(y_out), np.asarray(yr), atol=5e-4, rtol=5e-4)

    # match PyTorch output conventions: x is NCHW, w is (N, dim_3), y is (N, out)
    x_out_nchw = jnp.transpose(x_out, (0, 3, 1, 2))
    assert x_out_nchw.shape == (2, cfg['dim_3'], 2, 2)
    assert w_out.shape == (2, cfg['dim_3'])
    assert y_out.shape == (2, cfg['out_channels'])
    print("KERNEL_OK")
</pallas_src>

<mosaic_0001>
module attributes {stable_mosaic.version = 11 : i64} {
  func.func @_matmul_kernel(%arg0: i32, %arg1: i32, %arg2: i32, %arg3: memref<128x27xf32, #tpu.memory_space<vmem>>, %arg4: memref<27x16xf32, #tpu.memory_space<vmem>>, %arg5: memref<128x16xf32, #tpu.memory_space<vmem>>, %arg6: memref<128x16xf32, #tpu.memory_space<vmem>>) attributes {dimension_semantics = [#tpu.dimension_semantics<parallel>, #tpu.dimension_semantics<parallel>, #tpu.dimension_semantics<arbitrary>], iteration_bounds = array<i64: 1, 1, 1>, scalar_prefetch = 0 : i64, scratch_operands = 1 : i64, tpu.core_type = #tpu.core_type<tc>, window_params = [{transform_indices = @transform_0, window_bounds = array<i64: 128, 27>}, {transform_indices = @transform_1, window_bounds = array<i64: 27, 16>}, {transform_indices = @transform_2, window_bounds = array<i64: 128, 16>}]} {
    %c0_i32 = arith.constant 0 : i32
    %0 = arith.cmpi eq, %arg2, %c0_i32 : i32
    %1 = arith.extui %0 : i1 to i32
    %c0_i32_0 = arith.constant 0 : i32
    %2 = arith.cmpi ne, %1, %c0_i32_0 : i32
    scf.if %2 {
      %cst_10 = arith.constant 0.000000e+00 : f32
      %12 = vector.broadcast %cst_10 : f32 to vector<128x16xf32>
      %c0_11 = arith.constant 0 : index
      %c0_12 = arith.constant 0 : index
      %13 = vector.load %arg6[%c0_11, %c0_12] : memref<128x16xf32, #tpu.memory_space<vmem>>, vector<128x16xf32>
      tpu.vector_store %arg6[%c0_11, %c0_12], %12 {strides = array<i32>} : memref<128x16xf32, #tpu.memory_space<vmem>>, vector<128x16xf32>,
    } else {
    }
    %c0 = arith.constant 0 : index
    %c0_1 = arith.constant 0 : index
    %3 = vector.load %arg6[%c0, %c0_1] : memref<128x16xf32, #tpu.memory_space<vmem>>, vector<128x16xf32>
    %c0_2 = arith.constant 0 : index
    %c0_3 = arith.constant 0 : index
    %4 = vector.load %arg3[%c0_2, %c0_3] : memref<128x27xf32, #tpu.memory_space<vmem>>, vector<128x27xf32>
    %c0_4 = arith.constant 0 : index
    %c0_5 = arith.constant 0 : index
    %5 = vector.load %arg4[%c0_4, %c0_5] : memref<27x16xf32, #tpu.memory_space<vmem>>, vector<27x16xf32>
    %cst = arith.constant dense<0.000000e+00> : vector<128x16xf32>
    %6 = tpu.matmul %4, %5, %cst {dimension_numbers = #tpu.dot_dimension_numbers<[1], [0], [0], [1], [0, 0, 1, 1], [], []>} : vector<128x27xf32>, vector<27x16xf32>, vector<128x16xf32> -> vector<128x16xf32>
    %7 = arith.addf %3, %6 : vector<128x16xf32>
    %c0_6 = arith.constant 0 : index
    %c0_7 = arith.constant 0 : index
    %8 = vector.load %arg6[%c0_6, %c0_7] : memref<128x16xf32, #tpu.memory_space<vmem>>, vector<128x16xf32>
    tpu.vector_store %arg6[%c0_6, %c0_7], %7 {strides = array<i32>} : memref<128x16xf32, #tpu.memory_space<vmem>>, vector<128x16xf32>,
    %c0_i32_8 = arith.constant 0 : i32
    %9 = arith.cmpi eq, %arg2, %c0_i32_8 : i32
    %10 = arith.extui %9 : i1 to i32
    %c0_i32_9 = arith.constant 0 : i32
    %11 = arith.cmpi ne, %10, %c0_i32_9 : i32
    scf.if %11 {
      %c0_10 = arith.constant 0 : index
      %c0_11 = arith.constant 0 : index
      %12 = vector.load %arg6[%c0_10, %c0_11] : memref<128x16xf32, #tpu.memory_space<vmem>>, vector<128x16xf32>
      %c0_12 = arith.constant 0 : index
      %c0_13 = arith.constant 0 : index
      %13 = vector.load %arg5[%c0_12, %c0_13] : memref<128x16xf32, #tpu.memory_space<vmem>>, vector<128x16xf32>
      tpu.vector_store %arg5[%c0_12, %c0_13], %12 {strides = array<i32>} : memref<128x16xf32, #tpu.memory_space<vmem>>, vector<128x16xf32>,
    } else {
    }
    return
  }
  func.func @transform_0(%arg0: i32, %arg1: i32, %arg2: i32) -> (i32, i32) {
    %c0_i32 = arith.constant 0 : i32
    return %arg0, %arg2 : i32, i32
  }
  func.func @transform_1(%arg0: i32, %arg1: i32, %arg2: i32) -> (i32, i32) {
    %c0_i32 = arith.constant 0 : i32
    return %arg2, %arg1 : i32, i32
  }
  func.func @transform_2(%arg0: i32, %arg1: i32, %arg2: i32) -> (i32, i32) {
    %c0_i32 = arith.constant 0 : i32
    return %arg0, %arg1 : i32, i32
  }
}

</mosaic_0001>

<llo_original>
// kernel: tpu_custom_call.1
$region0: #{tpu_custom_call.1}
  #allocation0 [shape = 'u32[]', space=smem, size = 0x4, offset = 0x4, fixed_abs, tag = 'smem constant byte address 0x4 - core index']
  #allocation1 [shape = 'u32[144,128]{1,0:T(1,128)}', space=vmem, size = 0x12000, scoped, tag = 'internal scratch']
  #allocation2 [shape = 'f32[128,16]{1,0:T(8,128)}', space=vmem, size = 0x10000, scoped, tag = 'scratch operand']
  %s0 = inlined_call_operand.vmem [shape: f32[128,27], index: 0, kind: input, shape index: {}]
  %s1 = inlined_call_operand.vmem [shape: f32[27,16], index: 1, kind: input, shape index: {}]
  %s2 = inlined_call_operand.vmem [shape: f32[128,16], index: 2, kind: output, shape index: {}]
  %s3 = sld [smem:[#allocation0]]
  $region26: #{tpu_custom_call.1} parent=0
    _
  %s5 = ssub.s32 1, %s3
  %s6 = scalar_select 0, %s5, %s3
  // Predicated region
  $region2: #{tpu_custom_call.1} parent=0 // pred_check
    _
  $region3: #{tpu_custom_call.1} parent=0 // pred_check_branch
    %8 = sbr.rel (0) target = $region5
  $region4: #{tpu_custom_call.1} parent=0 // pred_region
    _
  $region5: #{tpu_custom_call.1} parent=0 // pred_fallthru
    _
  // Predicated region
  $region6: #{tpu_custom_call.1} parent=0 // pred_check
    _
  $region7: #{tpu_custom_call.1} parent=0 // pred_check_branch
    %10 = sbr.rel (0) target = $region9
  $region8: #{tpu_custom_call.1} parent=0 // pred_region
    _
  $region9: #{tpu_custom_call.1} parent=0 // pred_fallthru
    _
  %p11 = scmp.eq.s32.totalorder 0, 0
  // Predicated region
  $region10: #{tpu_custom_call.1} parent=0 // pred_check
    %p12 = pneg %p11
  $region11: #{tpu_custom_call.1} parent=0 // pred_check_branch
    %14 = sbr.rel (%p12) target = $region13
  $region12: #{tpu_custom_call.1} parent=0 // pred_region
    %vm15 = vcmask 130048
    %16 = vst.msk [vmem:[#allocation2] sm:$0xff] %vm15, 0.0
    %17 = vst.msk [vmem:[#allocation2 + $0x8] sm:$0xff] %vm15, 0.0
    %18 = vst.msk [vmem:[#allocation2 + $0x10] sm:$0xff] %vm15, 0.0
    %19 = vst.msk [vmem:[#allocation2 + $0x18] sm:$0xff] %vm15, 0.0
    %20 = vst.msk [vmem:[#allocation2 + $0x20] sm:$0xff] %vm15, 0.0
    %21 = vst.msk [vmem:[#allocation2 + $0x28] sm:$0xff] %vm15, 0.0
    %22 = vst.msk [vmem:[#allocation2 + $0x30] sm:$0xff] %vm15, 0.0
    %23 = vst.msk [vmem:[#allocation2 + $0x38] sm:$0xff] %vm15, 0.0
    %24 = vst.msk [vmem:[#allocation2 + $0x40] sm:$0xff] %vm15, 0.0
    %25 = vst.msk [vmem:[#allocation2 + $0x48] sm:$0xff] %vm15, 0.0
    %26 = vst.msk [vmem:[#allocation2 + $0x50] sm:$0xff] %vm15, 0.0
    %27 = vst.msk [vmem:[#allocation2 + $0x58] sm:$0xff] %vm15, 0.0
    %28 = vst.msk [vmem:[#allocation2 + $0x60] sm:$0xff] %vm15, 0.0
    %29 = vst.msk [vmem:[#allocation2 + $0x68] sm:$0xff] %vm15, 0.0
    %30 = vst.msk [vmem:[#allocation2 + $0x70] sm:$0xff] %vm15, 0.0
    %31 = vst.msk [vmem:[#allocation2 + $0x78] sm:$0xff] %vm15, 0.0
  $region13: #{tpu_custom_call.1} parent=0 // pred_fallthru
    _
  %v32 = vld [vmem:[#allocation2] sm:$0xff]
  %v33 = vld [vmem:[#allocation2 + $0x8] sm:$0xff]
  %v34 = vld [vmem:[#allocation2 + $0x10] sm:$0xff]
  %v35 = vld [vmem:[#allocation2 + $0x18] sm:$0xff]
  %v36 = vld [vmem:[#allocation2 + $0x20] sm:$0xff]
  %v37 = vld [vmem:[#allocation2 + $0x28] sm:$0xff]
  %v38 = vld [vmem:[#allocation2 + $0x30] sm:$0xff]
  %v39 = vld [vmem:[#allocation2 + $0x38] sm:$0xff]
  %v40 = vld [vmem:[#allocation2 + $0x40] sm:$0xff]
  %v41 = vld [vmem:[#allocation2 + $0x48] sm:$0xff]
  %v42 = vld [vmem:[#allocation2 + $0x50] sm:$0xff]
  %v43 = vld [vmem:[#allocation2 + $0x58] sm:$0xff]
  %v44 = vld [vmem:[#allocation2 + $0x60] sm:$0xff]
  %v45 = vld [vmem:[#allocation2 + $0x68] sm:$0xff]
  %v46 = vld [vmem:[#allocation2 + $0x70] sm:$0xff]
  %v47 = vld [vmem:[#allocation2 + $0x78] sm:$0xff]
  %v48 = vld [vmem:[%s0] sm:$0xff]
  %v49 = vld [vmem:[%s0 + $0x8] sm:$0xff]
  %v50 = vld [vmem:[%s0 + $0x10] sm:$0xff]
  %v51 = vld [vmem:[%s0 + $0x18] sm:$0xff]
  %v52 = vld [vmem:[%s0 + $0x20] sm:$0xff]
  %v53 = vld [vmem:[%s0 + $0x28] sm:$0xff]
  %v54 = vld [vmem:[%s0 + $0x30] sm:$0xff]
  %v55 = vld [vmem:[%s0 + $0x38] sm:$0xff]
  %v56 = vld [vmem:[%s0 + $0x40] sm:$0xff]
  %v57 = vld [vmem:[%s0 + $0x48] sm:$0xff]
  %v58 = vld [vmem:[%s0 + $0x50] sm:$0xff]
  %v59 = vld [vmem:[%s0 + $0x58] sm:$0xff]
  %v60 = vld [vmem:[%s0 + $0x60] sm:$0xff]
  %v61 = vld [vmem:[%s0 + $0x68] sm:$0xff]
  %v62 = vld [vmem:[%s0 + $0x70] sm:$0xff]
  %v63 = vld [vmem:[%s0 + $0x78] sm:$0xff]
  %v64 = vld [vmem:[%s1] sm:$0xff]
  %v65 = vld [vmem:[%s1 + $0x8] sm:$0xff]
  %v66 = vld [vmem:[%s1 + $0x10] sm:$0xff]
  %v67 = vld [vmem:[%s1 + $0x18] sm:$0x7]
  %vm68 = vcmask 220160
  %v70 = vsel %vm68, %v48, 0
  %v73 = vsel %vm68, %v49, 0
  %v76 = vsel %vm68, %v50, 0
  %v79 = vsel %vm68, %v51, 0
  %v82 = vsel %vm68, %v52, 0
  %v85 = vsel %vm68, %v53, 0
  %v88 = vsel %vm68, %v54, 0
  %v91 = vsel %vm68, %v55, 0
  %v94 = vsel %vm68, %v56, 0
  %v97 = vsel %vm68, %v57, 0
  %v100 = vsel %vm68, %v58, 0
  %v103 = vsel %vm68, %v59, 0
  %v106 = vsel %vm68, %v60, 0
  %v109 = vsel %vm68, %v61, 0
  %v112 = vsel %vm68, %v62, 0
  %v115 = vsel %vm68, %v63, 0
  %vm117 = vcmask 1042432
  %v119 = vsel %vm117, %v67, 0
  %121 = vmatprep.subr.mxu0 0.0
  %122 = vmatpush1.msra.mxu0 0.0
  %123 = vmatprep.subr.mxu0 0.0
  %124 = vmatpush1.msra.mxu0 0.0
  %125 = vmatprep.subr.mxu0 0.0
  %126 = vmatpush1.msra.mxu0 0.0
  %127 = vmatprep.subr.mxu0 0.0
  %128 = vmatpush1.msra.mxu0 0.0
  %129 = vmatprep.subr.mxu0 0.0
  %130 = vmatpush1.msra.mxu0 0.0
  %131 = vmatprep.subr.mxu0 0.0
  %132 = vmatpush1.msra.mxu0 0.0
  %133 = vmatprep.subr.mxu0 0.0
  %134 = vmatpush1.msra.mxu0 0.0
  %135 = vmatprep.subr.mxu0 0.0
  %136 = vmatpush1.msra.mxu0 0.0
  %137 = vmatprep.subr.mxu0 0.0
  %138 = vmatpush1.msra.mxu0 0.0
  %139 = vmatprep.subr.mxu0 0.0
  %140 = vmatpush1.msra.mxu0 0.0
  %141 = vmatprep.subr.mxu0 0.0
  %142 = vmatpush1.msra.mxu0 0.0
  %143 = vmatprep.subr.mxu0 0.0
  %144 = vmatpush1.msra.mxu0 0.0
  %145 = vmatprep.subr.mxu0 0.0
  %146 = vmatpush1.msra.mxu0 %v119
  %147 = vmatprep.subr.mxu0 0.0
  %148 = vmatpush1.msra.mxu0 %v66
  %149 = vmatprep.subr.mxu0 0.0
  %150 = vmatpush1.msra.mxu0 %v65
  %151 = vmatprep.subr.mxu0 0.0
  %152 = vmatpush1.msra.mxu0 %v64
  %153 = vmatprep.subr.mxu0 0.0
  %154 = vmatpush2.msra.mxu0 0.0
  %155 = vmatprep.subr.mxu0 0.0
  %156 = vmatpush2.msra.mxu0 0.0
  %157 = vmatprep.subr.mxu0 0.0
  %158 = vmatpush2.msra.mxu0 0.0
  %159 = vmatprep.subr.mxu0 0.0
  %160 = vmatpush2.msra.mxu0 0.0
  %161 = vmatprep.subr.mxu0 0.0
  %162 = vmatpush2.msra.mxu0 0.0
  %163 = vmatprep.subr.mxu0 0.0
  %164 = vmatpush2.msra.mxu0 0.0
  %165 = vmatprep.subr.mxu0 0.0
  %166 = vmatpush2.msra.mxu0 0.0
  %167 = vmatprep.subr.mxu0 0.0
  %168 = vmatpush2.msra.mxu0 0.0
  %169 = vmatprep.subr.mxu0 0.0
  %170 = vmatpush2.msra.mxu0 0.0
  %171 = vmatprep.subr.mxu0 0.0
  %172 = vmatpush2.msra.mxu0 0.0
  %173 = vmatprep.subr.mxu0 0.0
  %174 = vmatpush2.msra.mxu0 0.0
  %175 = vmatprep.subr.mxu0 0.0
  %176 = vmatpush2.msra.mxu0 0.0
  %177 = vmatprep.subr.mxu0 0.0
  %178 = vmatpush2.msra.mxu0 0.0
  %179 = vmatprep.subr.mxu0 0.0
  %180 = vmatpush2.msra.mxu0 0.0
  %181 = vmatprep.subr.mxu0 0.0
  %182 = vmatpush2.msra.mxu0 0.0
  %183 = vmatprep.subr.mxu0 0.0
  %184 = vmatpush2.msra.mxu0 0.0
  %185 = vmatprep.mubr.f32.mxu0 0.0
  %186 = vmatmul.mubr.f32.gmra.mxu0 %v70
  %v187 = vpop.f32.mrf.mxu0
  %v188 = vadd.f32 0.0, %v187
  %v189 = vpop.f32.mrf.mxu0
  %190 = vmatprep.mubr.f32.mxu0 0.0
  %191 = vmatmul.mubr.f32.gmra.mxu0 %v73
  %v192 = vpop.f32.mrf.mxu0
  %v193 = vadd.f32 0.0, %v192
  %v194 = vpop.f32.mrf.mxu0
  %195 = vmatprep.mubr.f32.mxu0 0.0
  %196 = vmatmul.mubr.f32.gmra.mxu0 %v76
  %v197 = vpop.f32.mrf.mxu0
  %v198 = vadd.f32 0.0, %v197
  %v199 = vpop.f32.mrf.mxu0
  %200 = vmatprep.mubr.f32.mxu0 0.0
  %201 = vmatmul.mubr.f32.gmra.mxu0 %v79
  %v202 = vpop.f32.mrf.mxu0
  %v203 = vadd.f32 0.0, %v202
  %v204 = vpop.f32.mrf.mxu0
  %205 = vmatprep.mubr.f32.mxu0 0.0
  %206 = vmatmul.mubr.f32.gmra.mxu0 %v82
  %v207 = vpop.f32.mrf.mxu0
  %v208 = vadd.f32 0.0, %v207
  %v209 = vpop.f32.mrf.mxu0
  %210 = vmatprep.mubr.f32.mxu0 0.0
  %211 = vmatmul.mubr.f32.gmra.mxu0 %v85
  %v212 = vpop.f32.mrf.mxu0
  %v213 = vadd.f32 0.0, %v212
  %v214 = vpop.f32.mrf.mxu0
  %215 = vmatprep.mubr.f32.mxu0 0.0
  %216 = vmatmul.mubr.f32.gmra.mxu0 %v88
  %v217 = vpop.f32.mrf.mxu0
  %v218 = vadd.f32 0.0, %v217
  %v219 = vpop.f32.mrf.mxu0
  %220 = vmatprep.mubr.f32.mxu0 0.0
  %221 = vmatmul.mubr.f32.gmra.mxu0 %v91
  %v222 = vpop.f32.mrf.mxu0
  %v223 = vadd.f32 0.0, %v222
  %v224 = vpop.f32.mrf.mxu0
  %225 = vmatprep.mubr.f32.mxu0 0.0
  %226 = vmatmul.mubr.f32.gmra.mxu0 %v94
  %v227 = vpop.f32.mrf.mxu0
  %v228 = vadd.f32 0.0, %v227
  %v229 = vpop.f32.mrf.mxu0
  %230 = vmatprep.mubr.f32.mxu0 0.0
  %231 = vmatmul.mubr.f32.gmra.mxu0 %v97
  %v232 = vpop.f32.mrf.mxu0
  %v233 = vadd.f32 0.0, %v232
  %v234 = vpop.f32.mrf.mxu0
  %235 = vmatprep.mubr.f32.mxu0 0.0
  %236 = vmatmul.mubr.f32.gmra.mxu0 %v100
  %v237 = vpop.f32.mrf.mxu0
  %v238 = vadd.f32 0.0, %v237
  %v239 = vpop.f32.mrf.mxu0
  %240 = vmatprep.mubr.f32.mxu0 0.0
  %241 = vmatmul.mubr.f32.gmra.mxu0 %v103
  %v242 = vpop.f32.mrf.mxu0
  %v243 = vadd.f32 0.0, %v242
  %v244 = vpop.f32.mrf.mxu0
  %245 = vmatprep.mubr.f32.mxu0 0.0
  %246 = vmatmul.mubr.f32.gmra.mxu0 %v106
  %v247 = vpop.f32.mrf.mxu0
  %v248 = vadd.f32 0.0, %v247
  %v249 = vpop.f32.mrf.mxu0
  %250 = vmatprep.mubr.f32.mxu0 0.0
  %251 = vmatmul.mubr.f32.gmra.mxu0 %v109
  %v252 = vpop.f32.mrf.mxu0
  %v253 = vadd.f32 0.0, %v252
  %v254 = vpop.f32.mrf.mxu0
  %255 = vmatprep.mubr.f32.mxu0 0.0
  %256 = vmatmul.mubr.f32.gmra.mxu0 %v112
  %v257 = vpop.f32.mrf.mxu0
  %v258 = vadd.f32 0.0, %v257
  %v259 = vpop.f32.mrf.mxu0
  %260 = vmatprep.mubr.f32.mxu0 0.0
  %261 = vmatmul.mubr.f32.gmra.mxu0 %v115
  %v262 = vpop.f32.mrf.mxu0
  %v263 = vadd.f32 0.0, %v262
  %v264 = vpop.f32.mrf.mxu0
  %265 = vdwg.mxu0
  %v266 = vadd.f32 %v32, %v188
  %v267 = vadd.f32 %v33, %v193
  %v268 = vadd.f32 %v34, %v198
  %v269 = vadd.f32 %v35, %v203
  %v270 = vadd.f32 %v36, %v208
  %v271 = vadd.f32 %v37, %v213
  %v272 = vadd.f32 %v38, %v218
  %v273 = vadd.f32 %v39, %v223
  %v274 = vadd.f32 %v40, %v228
  %v275 = vadd.f32 %v41, %v233
  %v276 = vadd.f32 %v42, %v238
  %v277 = vadd.f32 %v43, %v243
  %v278 = vadd.f32 %v44, %v248
  %v279 = vadd.f32 %v45, %v253
  %v280 = vadd.f32 %v46, %v258
  %v281 = vadd.f32 %v47, %v263
  %vm282 = vcmask 130048
  %283 = vst.msk [vmem:[#allocation2] sm:$0xff] %vm282, %v266
  %284 = vst.msk [vmem:[#allocation2 + $0x8] sm:$0xff] %vm282, %v267
  %285 = vst.msk [vmem:[#allocation2 + $0x10] sm:$0xff] %vm282, %v268
  %286 = vst.msk [vmem:[#allocation2 + $0x18] sm:$0xff] %vm282, %v269
  %287 = vst.msk [vmem:[#allocation2 + $0x20] sm:$0xff] %vm282, %v270
  %288 = vst.msk [vmem:[#allocation2 + $0x28] sm:$0xff] %vm282, %v271
  %289 = vst.msk [vmem:[#allocation2 + $0x30] sm:$0xff] %vm282, %v272
  %290 = vst.msk [vmem:[#allocation2 + $0x38] sm:$0xff] %vm282, %v273
  %291 = vst.msk [vmem:[#allocation2 + $0x40] sm:$0xff] %vm282, %v274
  %292 = vst.msk [vmem:[#allocation2 + $0x48] sm:$0xff] %vm282, %v275
  %293 = vst.msk [vmem:[#allocation2 + $0x50] sm:$0xff] %vm282, %v276
  %294 = vst.msk [vmem:[#allocation2 + $0x58] sm:$0xff] %vm282, %v277
  %295 = vst.msk [vmem:[#allocation2 + $0x60] sm:$0xff] %vm282, %v278
  %296 = vst.msk [vmem:[#allocation2 + $0x68] sm:$0xff] %vm282, %v279
  %297 = vst.msk [vmem:[#allocation2 + $0x70] sm:$0xff] %vm282, %v280
  %298 = vst.msk [vmem:[#allocation2 + $0x78] sm:$0xff] %vm282, %v281
  // Predicated region
  $region14: #{tpu_custom_call.1} parent=0 // pred_check
    %p299 = pneg %p11
  $region15: #{tpu_custom_call.1} parent=0 // pred_check_branch
    %301 = sbr.rel (%p299) target = $region17
  $region16: #{tpu_custom_call.1} parent=0 // pred_region
    %v302 = vld [vmem:[#allocation2] sm:$0xff]
    %v303 = vld [vmem:[#allocation2 + $0x8] sm:$0xff]
    %v304 = vld [vmem:[#allocation2 + $0x10] sm:$0xff]
    %v305 = vld [vmem:[#allocation2 + $0x18] sm:$0xff]
    %v306 = vld [vmem:[#allocation2 + $0x20] sm:$0xff]
    %v307 = vld [vmem:[#allocation2 + $0x28] sm:$0xff]
    %v308 = vld [vmem:[#allocation2 + $0x30] sm:$0xff]
    %v309 = vld [vmem:[#allocation2 + $0x38] sm:$0xff]
    %v310 = vld [vmem:[#allocation2 + $0x40] sm:$0xff]
    %v311 = vld [vmem:[#allocation2 + $0x48] sm:$0xff]
    %v312 = vld [vmem:[#allocation2 + $0x50] sm:$0xff]
    %v313 = vld [vmem:[#allocation2 + $0x58] sm:$0xff]
    %v314 = vld [vmem:[#allocation2 + $0x60] sm:$0xff]
    %v315 = vld [vmem:[#allocation2 + $0x68] sm:$0xff]
    %v316 = vld [vmem:[#allocation2 + $0x70] sm:$0xff]
    %v317 = vld [vmem:[#allocation2 + $0x78] sm:$0xff]
    %318 = vst.msk [vmem:[%s2] sm:$0xff] %vm282, %v302
    %319 = vst.msk [vmem:[%s2 + $0x8] sm:$0xff] %vm282, %v303
    %320 = vst.msk [vmem:[%s2 + $0x10] sm:$0xff] %vm282, %v304
    %321 = vst.msk [vmem:[%s2 + $0x18] sm:$0xff] %vm282, %v305
    %322 = vst.msk [vmem:[%s2 + $0x20] sm:$0xff] %vm282, %v306
    %323 = vst.msk [vmem:[%s2 + $0x28] sm:$0xff] %vm282, %v307
    %324 = vst.msk [vmem:[%s2 + $0x30] sm:$0xff] %vm282, %v308
    %325 = vst.msk [vmem:[%s2 + $0x38] sm:$0xff] %vm282, %v309
    %326 = vst.msk [vmem:[%s2 + $0x40] sm:$0xff] %vm282, %v310
    %327 = vst.msk [vmem:[%s2 + $0x48] sm:$0xff] %vm282, %v311
    %328 = vst.msk [vmem:[%s2 + $0x50] sm:$0xff] %vm282, %v312
    %329 = vst.msk [vmem:[%s2 + $0x58] sm:$0xff] %vm282, %v313
    %330 = vst.msk [vmem:[%s2 + $0x60] sm:$0xff] %vm282, %v314
    %331 = vst.msk [vmem:[%s2 + $0x68] sm:$0xff] %vm282, %v315
    %332 = vst.msk [vmem:[%s2 + $0x70] sm:$0xff] %vm282, %v316
    %333 = vst.msk [vmem:[%s2 + $0x78] sm:$0xff] %vm282, %v317
  $region17: #{tpu_custom_call.1} parent=0 // pred_fallthru
    _
  // Predicated region
  $region18: #{tpu_custom_call.1} parent=0 // pred_check
    _
  $region19: #{tpu_custom_call.1} parent=0 // pred_check_branch
    %335 = sbr.rel (0) target = $region21
  $region20: #{tpu_custom_call.1} parent=0 // pred_region
    _
  $region21: #{tpu_custom_call.1} parent=0 // pred_fallthru
    _
  // Predicated region
  $region22: #{tpu_custom_call.1} parent=0 // pred_check
    _
  $region23: #{tpu_custom_call.1} parent=0 // pred_check_branch
    %337 = sbr.rel (0) target = $region25
  $region24: #{tpu_custom_call.1} parent=0 // pred_region
    _
  $region25: #{tpu_custom_call.1} parent=0 // pred_fallthru
    _

</llo_original>
